<compile_context>
chip_gen: v7x
topology: tpu7x:2x2x1
jax: 0.10.0
libtpu: 0.0.40
codegen_flags: <defaults>
</compile_context>

<pallas_src>
import functools

import jax
import jax.numpy as jnp
from jax import lax
from jax.experimental import pallas as pl
from jax.experimental.pallas import tpu as pltpu

NUM_CLASSES = 6


def _custom_loss_kernel(yp_ref, yb_ref, out_ref,
                        ce_acc, sl1_acc, cnt_acc, *,
                        n_valid, num_classes):
    i = pl.program_id(0)            # chunk index (parallel -> 2 TCs on v7x)
    j = pl.program_id(1)            # lane tile within chunk (sequential)
    g = pl.num_programs(1)

    @pl.when(j == 0)
    def _init():
        ce_acc[...] = jnp.zeros_like(ce_acc)
        sl1_acc[...] = jnp.zeros_like(sl1_acc)
        cnt_acc[...] = jnp.zeros_like(cnt_acc)

    d_full, tn = yp_ref.shape

    # Lane validity.  Inputs are NOT padded: the tail of the last (ragged)
    # tile and the whole of an "overshoot" tile hold unspecified data, so all
    # reductions below select with jnp.where(valid, x, 0) — never multiply —
    # to keep NaN/Inf garbage out.
    t = i * g + j                                              # logical tile
    col = lax.broadcasted_iota(jnp.int32, (1, tn), 1)
    valid = (t * tn + col) < n_valid                           # (1, TN) bool

    # ---- class path: runs on a single (8,128) sublane tile ---------------
    cls_rows = min(8, d_full)
    yp_c = yp_ref[0:cls_rows, :].astype(jnp.float32)           # (8, TN)
    yb_c = yb_ref[0:cls_rows, :].astype(jnp.float32)
    row_c = lax.broadcasted_iota(jnp.int32, (cls_rows, 1), 0)  # small iota
    is_cls = row_c < num_classes                               # (8, 1)
    neg_inf = jnp.float32(-jnp.inf)

    # target class = argmax over class rows of y_batch (first occurrence)
    c_hat = jnp.where(is_cls, yb_c, neg_inf)
    cmax = jnp.max(c_hat, axis=0, keepdims=True)               # (1, TN)
    tgt = jnp.min(jnp.where((c_hat == cmax) & is_cls, row_c, num_classes),
                  axis=0, keepdims=True)                       # (1, TN) int32
    onehot = (row_c == tgt).astype(jnp.float32)                # (8, TN)

    # cross entropy = logsumexp(class logits) - logit[target]
    c_pre = jnp.where(is_cls, yp_c, neg_inf)
    m = jnp.max(c_pre, axis=0, keepdims=True)                  # (1, TN)
    lse = m + jnp.log(jnp.sum(jnp.exp(c_pre - m), axis=0, keepdims=True))
    logit_t = jnp.sum(yp_c * onehot, axis=0, keepdims=True)
    ce = jnp.where(valid, lse - logit_t, 0.0)                  # (1, TN)

    # ---- smooth-L1 on box rows at defect positions (target class != 0) ----
    defect_b = (tgt != 0) & valid                              # (1, TN) bool
    yp = yp_ref[...].astype(jnp.float32)                       # (D, TN)
    yb = yb_ref[...].astype(jnp.float32)
    diff = yp - yb
    ad = jnp.abs(diff)
    sl1 = jnp.where(ad < 1.0, 0.5 * diff * diff, ad - 0.5)     # (D, TN)
    row_d = lax.broadcasted_iota(jnp.int32, (d_full, 1), 0)    # small iota
    is_box = row_d >= num_classes                              # (D, 1)
    sl1_box = jnp.where(is_box & defect_b, sl1, 0.0)
    sl1_partial = jnp.sum(sl1_box, axis=0, keepdims=True)      # (1, TN)

    ce_acc[...] += ce
    sl1_acc[...] += sl1_partial
    cnt_acc[...] += defect_b.astype(jnp.float32)

    @pl.when(j == g - 1)
    def _finalize():
        ce_s = jnp.sum(ce_acc[...])
        sl1_s = jnp.sum(sl1_acc[...])
        cnt_s = jnp.sum(cnt_acc[...])
        sub = lax.broadcasted_iota(jnp.int32, out_ref.shape, 1)
        out_ref[...] = jnp.where(
            sub == 0, ce_s,
            jnp.where(sub == 1, sl1_s,
                      jnp.where(sub == 2, cnt_s, 0.0)))


def custom_loss(y_pre, y_batch, beta=1.0, *, lane_tile=32768, num_chunks=2):
    """Pallas implementation of CustomLoss.forward (returns a scalar f32)."""
    assert y_pre.shape == y_batch.shape, (y_pre.shape, y_batch.shape)
    B, S, D = y_pre.shape
    assert D > NUM_CLASSES
    N = B * S
    box_dim = D - NUM_CLASSES

    # Lane-dense relayout: channels -> sublanes, positions -> lanes.  Pure
    # reshape + transpose (fuses with the producer under jit); NO padding pass.
    yp = jnp.transpose(y_pre.reshape(N, D), (1, 0))    # (D, N)
    yb = jnp.transpose(y_batch.reshape(N, D), (1, 0))

    n128 = ((N + 127) // 128) * 128
    tn = min(lane_tile, n128)                          # multiple of 128
    num_tiles = pl.cdiv(N, tn)                         # lane tiles (ragged ok)
    n_chunks = max(1, min(num_chunks, num_tiles))      # parallel super-chunks
    g = pl.cdiv(num_tiles, n_chunks)                   # tiles per chunk

    def in_map(i, j):
        # Clamp so the (rare) overshoot tile of the last chunk re-reads the
        # final block; its lanes are fully masked inside the kernel.
        return (0, jnp.minimum(i * g + j, num_tiles - 1))

    kernel = functools.partial(
        _custom_loss_kernel, n_valid=N, num_classes=NUM_CLASSES)

    cost = pl.CostEstimate(
        flops=120 * N,
        transcendentals=(NUM_CLASSES + 2) * N,
        bytes_accessed=2 * N * D * y_pre.dtype.itemsize)

    partials = pl.pallas_call(
        kernel,
        out_shape=jax.ShapeDtypeStruct((n_chunks, 8, 128), jnp.float32),
        grid_spec=pltpu.PrefetchScalarGridSpec(
            num_scalar_prefetch=0,
            grid=(n_chunks, g),
            in_specs=[
                pl.BlockSpec((D, tn), in_map),         # y_pre   (D, N)
                pl.BlockSpec((D, tn), in_map),         # y_batch (D, N)
            ],
            out_specs=pl.BlockSpec((1, 8, 128), lambda i, j: (i, 0, 0)),
            scratch_shapes=[
                pltpu.VMEM((1, tn), jnp.float32),      # per-lane CE partials
                pltpu.VMEM((1, tn), jnp.float32),      # per-lane SL1 partials
                pltpu.VMEM((1, tn), jnp.float32),      # per-lane defect count
            ],
        ),
        compiler_params=pltpu.CompilerParams(
            dimension_semantics=("parallel", "arbitrary"),
            vmem_limit_bytes=32 * 1024 * 1024),        # ~11.5 MiB used @32768
        cost_estimate=cost,
    )(yp, yb)

    # Combine per-chunk partials (tiny XLA epilogue).
    ce_sum = jnp.sum(partials[:, 0, 0])
    sl1_sum = jnp.sum(partials[:, 1, 0])
    n_def = jnp.sum(partials[:, 2, 0])
    l_class = ce_sum / jnp.float32(N)
    n_sel = n_def * jnp.float32(box_dim)
    l_box = jnp.where(n_sel > 0.0, sl1_sum / jnp.maximum(n_sel, 1.0), 0.0)
    return l_class + jnp.float32(beta) * l_box


def _custom_loss_ref(y_pre, y_batch, beta=1.0):
    """Pure-JAX reference mirroring the PyTorch forward (silent check)."""
    c_pre = y_pre[:, :, :NUM_CLASSES].astype(jnp.float32)
    b_pre = y_pre[:, :, NUM_CLASSES:].astype(jnp.float32)
    c_hat = y_batch[:, :, :NUM_CLASSES].astype(jnp.float32)
    b_hat = y_batch[:, :, NUM_CLASSES:].astype(jnp.float32)
    tgt = jnp.argmax(c_hat, axis=2)
    lse = jax.scipy.special.logsumexp(c_pre, axis=2)
    logit_t = jnp.take_along_axis(c_pre, tgt[..., None], axis=2)[..., 0]
    l_class = jnp.mean(lse - logit_t)
    mask = (tgt != 0).astype(jnp.float32)[..., None]
    d = b_pre - b_hat
    ad = jnp.abs(d)
    sl1 = jnp.where(ad < 1.0, 0.5 * d * d, ad - 0.5)
    n_sel = jnp.sum(mask) * b_pre.shape[-1]
    l_box = jnp.where(n_sel > 0, jnp.sum(sl1 * mask) / jnp.maximum(n_sel, 1.0), 0.0)
    return l_class + beta * l_box


if __name__ == "__main__":
    key = jax.random.PRNGKey(0)
    BOX = 4
    D = NUM_CLASSES + BOX
    k1, k2, k3, k4 = jax.random.split(key, 4)

    # Case 1: small, single ragged tile (N=16 < 128 lanes).
    B, S = 2, 8
    y_pre = jax.random.normal(k1, (B, S, D), dtype=jnp.float32)
    y_batch = jax.random.normal(k2, (B, S, D), dtype=jnp.float32)
    loss = custom_loss(y_pre, y_batch, beta=1.0)
    jax.block_until_ready(loss)
    ref = _custom_loss_ref(y_pre, y_batch, beta=1.0)
    assert jnp.allclose(loss, ref, rtol=1e-5, atol=1e-5), (loss, ref)

    # Case 2: multi-tile, 2 parallel chunks, ragged last tile.
    B2, S2 = 2, 1000   # N = 2000, tn=256 -> 8 tiles -> 2 chunks x 4 tiles
    y_pre2 = jax.random.normal(k3, (B2, S2, D), dtype=jnp.float32)
    y_batch2 = jax.random.normal(k4, (B2, S2, D), dtype=jnp.float32)
    loss2 = custom_loss(y_pre2, y_batch2, beta=0.5, lane_tile=256)
    jax.block_until_ready(loss2)
    ref2 = _custom_loss_ref(y_pre2, y_batch2, beta=0.5)
    assert jnp.allclose(loss2, ref2, rtol=1e-5, atol=1e-5), (loss2, ref2)

    # Case 3: odd tile count -> exercises the clamped overshoot tile.
    loss3 = custom_loss(y_pre2, y_batch2, beta=2.0, lane_tile=768)  # 3 tiles / 2 chunks
    jax.block_until_ready(loss3)
    ref3 = _custom_loss_ref(y_pre2, y_batch2, beta=2.0)
    assert jnp.allclose(loss3, ref3, rtol=1e-5, atol=1e-5), (loss3, ref3)

    # Case 4: no defects anywhere -> L_box = 0 branch.
    y_batch0 = y_batch.at[:, :, 0].set(10.0)
    loss4 = custom_loss(y_pre, y_batch0, beta=1.0)
    jax.block_until_ready(loss4)
    ref4 = _custom_loss_ref(y_pre, y_batch0, beta=1.0)
    assert jnp.allclose(loss4, ref4, rtol=1e-5, atol=1e-5), (loss4, ref4)

    print("KERNEL_OK")
</pallas_src>

<mosaic_0001>
module attributes {stable_mosaic.version = 11 : i64} {
  func.func @_custom_loss_kernel(%arg0: i32, %arg1: i32, %arg2: memref<10x128xf32, #tpu.memory_space<vmem>>, %arg3: memref<10x128xf32, #tpu.memory_space<vmem>>, %arg4: memref<1x8x128xf32, #tpu.memory_space<vmem>>, %arg5: memref<1x128xf32, #tpu.memory_space<vmem>>, %arg6: memref<1x128xf32, #tpu.memory_space<vmem>>, %arg7: memref<1x128xf32, #tpu.memory_space<vmem>>) attributes {dimension_semantics = [#tpu.dimension_semantics<parallel>, #tpu.dimension_semantics<arbitrary>], iteration_bounds = array<i64: 1, 1>, scalar_prefetch = 0 : i64, scratch_operands = 3 : i64, tpu.core_type = #tpu.core_type<tc>, window_params = [{transform_indices = @transform_0, window_bounds = array<i64: 10, 128>}, {transform_indices = @transform_1, window_bounds = array<i64: 10, 128>}, {transform_indices = @transform_2, window_bounds = array<i64: 1, 8, 128>}]} {
    %c0_i32 = arith.constant 0 : i32
    %0 = arith.cmpi eq, %arg1, %c0_i32 : i32
    %1 = arith.extui %0 : i1 to i32
    %c0_i32_0 = arith.constant 0 : i32
    %2 = arith.cmpi ne, %1, %c0_i32_0 : i32
    scf.if %2 {
      %cst_37 = arith.constant 0.000000e+00 : f32
      %95 = vector.broadcast %cst_37 : f32 to vector<1x128xf32>
      %c0_38 = arith.constant 0 : index
      %c0_39 = arith.constant 0 : index
      %96 = vector.load %arg5[%c0_38, %c0_39] : memref<1x128xf32, #tpu.memory_space<vmem>>, vector<1x128xf32>
      tpu.vector_store %arg5[%c0_38, %c0_39], %95 {strides = array<i32>} : memref<1x128xf32, #tpu.memory_space<vmem>>, vector<1x128xf32>,
      %cst_40 = arith.constant 0.000000e+00 : f32
      %97 = vector.broadcast %cst_40 : f32 to vector<1x128xf32>
      %c0_41 = arith.constant 0 : index
      %c0_42 = arith.constant 0 : index
      %98 = vector.load %arg6[%c0_41, %c0_42] : memref<1x128xf32, #tpu.memory_space<vmem>>, vector<1x128xf32>
      tpu.vector_store %arg6[%c0_41, %c0_42], %97 {strides = array<i32>} : memref<1x128xf32, #tpu.memory_space<vmem>>, vector<1x128xf32>,
      %cst_43 = arith.constant 0.000000e+00 : f32
      %99 = vector.broadcast %cst_43 : f32 to vector<1x128xf32>
      %c0_44 = arith.constant 0 : index
      %c0_45 = arith.constant 0 : index
      %100 = vector.load %arg7[%c0_44, %c0_45] : memref<1x128xf32, #tpu.memory_space<vmem>>, vector<1x128xf32>
      tpu.vector_store %arg7[%c0_44, %c0_45], %99 {strides = array<i32>} : memref<1x128xf32, #tpu.memory_space<vmem>>, vector<1x128xf32>,
    } else {
    }
    %c1_i32 = arith.constant 1 : i32
    %3 = arith.muli %arg0, %c1_i32 : i32
    %4 = arith.addi %3, %arg1 : i32
    %5 = tpu.iota {dimensions = array<i32: 1>} : vector<1x128xi32>
    %c128_i32 = arith.constant 128 : i32
    %6 = arith.muli %4, %c128_i32 : i32
    %7 = vector.broadcast %6 : i32 to vector<1x128xi32>
    %8 = arith.addi %7, %5 : vector<1x128xi32>
    %c16_i32 = arith.constant 16 : i32
    %9 = vector.broadcast %c16_i32 : i32 to vector<1x128xi32>
    %10 = arith.cmpi slt, %8, %9 : vector<1x128xi32>
    %c0 = arith.constant 0 : index
    %c0_1 = arith.constant 0 : index
    %11 = vector.load %arg2[%c0, %c0_1] : memref<10x128xf32, #tpu.memory_space<vmem>>, vector<8x128xf32>
    %c0_2 = arith.constant 0 : index
    %c0_3 = arith.constant 0 : index
    %12 = vector.load %arg3[%c0_2, %c0_3] : memref<10x128xf32, #tpu.memory_space<vmem>>, vector<8x128xf32>
    %13 = tpu.iota {dimensions = array<i32: 0>} : vector<8x1xi32>
    %c6_i32 = arith.constant 6 : i32
    %14 = vector.broadcast %c6_i32 : i32 to vector<8x1xi32>
    %15 = arith.cmpi slt, %13, %14 : vector<8x1xi32>
    %cst = arith.constant 0xFF800000 : f32
    %16 = vector.shape_cast %15 : vector<8x1xi1> to vector<8x1xi1>
    %17 = vector.broadcast %16 : vector<8x1xi1> to vector<8x128xi1>
    %18 = vector.broadcast %cst : f32 to vector<8x128xf32>
    %19 = arith.select %17, %12, %18 : vector<8x128xi1>, vector<8x128xf32>
    %cst_4 = arith.constant dense<0xFF800000> : vector<128xf32>
    %20 = vector.multi_reduction <maximumf>, %19, %cst_4 [0] : vector<8x128xf32> to vector<128xf32>
    %21 = vector.shape_cast %20 : vector<128xf32> to vector<1x128xf32>
    %22 = vector.broadcast %21 : vector<1x128xf32> to vector<8x128xf32>
    %23 = arith.cmpf oeq, %19, %22 : vector<8x128xf32>
    %24 = vector.broadcast %15 : vector<8x1xi1> to vector<8x128xi1>
    %25 = arith.andi %23, %24 : vector<8x128xi1>
    %c6_i32_5 = arith.constant 6 : i32
    %26 = vector.shape_cast %13 : vector<8x1xi32> to vector<8x1xi32>
    %27 = vector.broadcast %26 : vector<8x1xi32> to vector<8x128xi32>
    %28 = vector.broadcast %c6_i32_5 : i32 to vector<8x128xi32>
    %29 = arith.select %25, %27, %28 : vector<8x128xi1>, vector<8x128xi32>
    %cst_6 = arith.constant dense<2147483647> : vector<128xi32>
    %30 = vector.multi_reduction <minsi>, %29, %cst_6 [0] : vector<8x128xi32> to vector<128xi32>
    %31 = vector.shape_cast %30 : vector<128xi32> to vector<1x128xi32>
    %32 = vector.broadcast %13 : vector<8x1xi32> to vector<8x128xi32>
    %33 = vector.broadcast %31 : vector<1x128xi32> to vector<8x128xi32>
    %34 = arith.cmpi eq, %32, %33 : vector<8x128xi32>
    %35 = arith.extui %34 : vector<8x128xi1> to vector<8x128xi32>
    %36 = arith.sitofp %35 : vector<8x128xi32> to vector<8x128xf32>
    %cst_7 = arith.constant 0xFF800000 : f32
    %37 = vector.shape_cast %15 : vector<8x1xi1> to vector<8x1xi1>
    %38 = vector.broadcast %37 : vector<8x1xi1> to vector<8x128xi1>
    %39 = vector.broadcast %cst_7 : f32 to vector<8x128xf32>
    %40 = arith.select %38, %11, %39 : vector<8x128xi1>, vector<8x128xf32>
    %cst_8 = arith.constant dense<0xFF800000> : vector<128xf32>
    %41 = vector.multi_reduction <maximumf>, %40, %cst_8 [0] : vector<8x128xf32> to vector<128xf32>
    %42 = vector.shape_cast %41 : vector<128xf32> to vector<1x128xf32>
    %43 = vector.broadcast %42 : vector<1x128xf32> to vector<8x128xf32>
    %44 = arith.subf %40, %43 : vector<8x128xf32>
    %45 = math.exp %44 : vector<8x128xf32>
    %cst_9 = arith.constant dense<0.000000e+00> : vector<128xf32>
    %46 = vector.multi_reduction <add>, %45, %cst_9 [0] : vector<8x128xf32> to vector<128xf32>
    %47 = vector.shape_cast %46 : vector<128xf32> to vector<1x128xf32>
    %48 = math.log %47 : vector<1x128xf32>
    %49 = arith.addf %42, %48 : vector<1x128xf32>
    %50 = arith.mulf %11, %36 : vector<8x128xf32>
    %cst_10 = arith.constant dense<0.000000e+00> : vector<128xf32>
    %51 = vector.multi_reduction <add>, %50, %cst_10 [0] : vector<8x128xf32> to vector<128xf32>
    %52 = vector.shape_cast %51 : vector<128xf32> to vector<1x128xf32>
    %53 = arith.subf %49, %52 : vector<1x128xf32>
    %cst_11 = arith.constant 0.000000e+00 : f32
    %54 = vector.broadcast %cst_11 : f32 to vector<1x128xf32>
    %55 = arith.select %10, %53, %54 : vector<1x128xi1>, vector<1x128xf32>
    %c0_i32_12 = arith.constant 0 : i32
    %56 = vector.broadcast %c0_i32_12 : i32 to vector<1x128xi32>
    %57 = arith.cmpi ne, %31, %56 : vector<1x128xi32>
    %58 = arith.andi %57, %10 : vector<1x128xi1>
    %c0_13 = arith.constant 0 : index
    %c0_14 = arith.constant 0 : index
    %59 = vector.load %arg2[%c0_13, %c0_14] : memref<10x128xf32, #tpu.memory_space<vmem>>, vector<10x128xf32>
    %c0_15 = arith.constant 0 : index
    %c0_16 = arith.constant 0 : index
    %60 = vector.load %arg3[%c0_15, %c0_16] : memref<10x128xf32, #tpu.memory_space<vmem>>, vector<10x128xf32>
    %61 = arith.subf %59, %60 : vector<10x128xf32>
    %62 = math.absf %61 : vector<10x128xf32>
    %cst_17 = arith.constant 1.000000e+00 : f32
    %63 = vector.broadcast %cst_17 : f32 to vector<10x128xf32>
    %64 = arith.cmpf olt, %62, %63 : vector<10x128xf32>
    %cst_18 = arith.constant 5.000000e-01 : f32
    %65 = vector.broadcast %cst_18 : f32 to vector<10x128xf32>
    %66 = arith.mulf %65, %61 : vector<10x128xf32>
    %67 = arith.mulf %66, %61 : vector<10x128xf32>
    %cst_19 = arith.constant 5.000000e-01 : f32
    %68 = vector.broadcast %cst_19 : f32 to vector<10x128xf32>
    %69 = arith.subf %62, %68 : vector<10x128xf32>
    %70 = arith.select %64, %67, %69 : vector<10x128xi1>, vector<10x128xf32>
    %71 = tpu.iota {dimensions = array<i32: 0>} : vector<10x1xi32>
    %c6_i32_20 = arith.constant 6 : i32
    %72 = vector.broadcast %c6_i32_20 : i32 to vector<10x1xi32>
    %73 = arith.cmpi sge, %71, %72 : vector<10x1xi32>
    %74 = vector.broadcast %73 : vector<10x1xi1> to vector<10x128xi1>
    %75 = vector.broadcast %58 : vector<1x128xi1> to vector<10x128xi1>
    %76 = arith.andi %74, %75 : vector<10x128xi1>
    %cst_21 = arith.constant 0.000000e+00 : f32
    %77 = vector.broadcast %cst_21 : f32 to vector<10x128xf32>
    %78 = arith.select %76, %70, %77 : vector<10x128xi1>, vector<10x128xf32>
    %cst_22 = arith.constant dense<0.000000e+00> : vector<128xf32>
    %79 = vector.multi_reduction <add>, %78, %cst_22 [0] : vector<10x128xf32> to vector<128xf32>
    %80 = vector.shape_cast %79 : vector<128xf32> to vector<1x128xf32>
    %c0_23 = arith.constant 0 : index
    %c0_24 = arith.constant 0 : index
    %81 = vector.load %arg5[%c0_23, %c0_24] : memref<1x128xf32, #tpu.memory_space<vmem>>, vector<1x128xf32>
    %82 = arith.addf %81, %55 : vector<1x128xf32>
    %c0_25 = arith.constant 0 : index
    %c0_26 = arith.constant 0 : index
    %83 = vector.load %arg5[%c0_25, %c0_26] : memref<1x128xf32, #tpu.memory_space<vmem>>, vector<1x128xf32>
    tpu.vector_store %arg5[%c0_25, %c0_26], %82 {strides = array<i32>} : memref<1x128xf32, #tpu.memory_space<vmem>>, vector<1x128xf32>,
    %c0_27 = arith.constant 0 : index
    %c0_28 = arith.constant 0 : index
    %84 = vector.load %arg6[%c0_27, %c0_28] : memref<1x128xf32, #tpu.memory_space<vmem>>, vector<1x128xf32>
    %85 = arith.addf %84, %80 : vector<1x128xf32>
    %c0_29 = arith.constant 0 : index
    %c0_30 = arith.constant 0 : index
    %86 = vector.load %arg6[%c0_29, %c0_30] : memref<1x128xf32, #tpu.memory_space<vmem>>, vector<1x128xf32>
    tpu.vector_store %arg6[%c0_29, %c0_30], %85 {strides = array<i32>} : memref<1x128xf32, #tpu.memory_space<vmem>>, vector<1x128xf32>,
    %c0_31 = arith.constant 0 : index
    %c0_32 = arith.constant 0 : index
    %87 = vector.load %arg7[%c0_31, %c0_32] : memref<1x128xf32, #tpu.memory_space<vmem>>, vector<1x128xf32>
    %88 = arith.extui %58 : vector<1x128xi1> to vector<1x128xi32>
    %89 = arith.sitofp %88 : vector<1x128xi32> to vector<1x128xf32>
    %90 = arith.addf %87, %89 : vector<1x128xf32>
    %c0_33 = arith.constant 0 : index
    %c0_34 = arith.constant 0 : index
    %91 = vector.load %arg7[%c0_33, %c0_34] : memref<1x128xf32, #tpu.memory_space<vmem>>, vector<1x128xf32>
    tpu.vector_store %arg7[%c0_33, %c0_34], %90 {strides = array<i32>} : memref<1x128xf32, #tpu.memory_space<vmem>>, vector<1x128xf32>,
    %c0_i32_35 = arith.constant 0 : i32
    %92 = arith.cmpi eq, %arg1, %c0_i32_35 : i32
    %93 = arith.extui %92 : i1 to i32
    %c0_i32_36 = arith.constant 0 : i32
    %94 = arith.cmpi ne, %93, %c0_i32_36 : i32
    scf.if %94 {
      %c0_37 = arith.constant 0 : index
      %c0_38 = arith.constant 0 : index
      %95 = vector.load %arg5[%c0_37, %c0_38] : memref<1x128xf32, #tpu.memory_space<vmem>>, vector<1x128xf32>
      %96 = vector.shape_cast %95 : vector<1x128xf32> to vector<1x1x128xf32>
      %cst_39 = arith.constant dense<0.000000e+00> : vector<1xf32>
      %97 = vector.multi_reduction <add>, %96, %cst_39 [1, 2] : vector<1x1x128xf32> to vector<1xf32>
      %98 = vector.shape_cast %97 : vector<1xf32> to vector<1x1x1xf32>
      %99 = vector.extract %98[0, 0, 0] : f32 from vector<1x1x1xf32>
      %c0_40 = arith.constant 0 : index
      %c0_41 = arith.constant 0 : index
      %100 = vector.load %arg6[%c0_40, %c0_41] : memref<1x128xf32, #tpu.memory_space<vmem>>, vector<1x128xf32>
      %101 = vector.shape_cast %100 : vector<1x128xf32> to vector<1x1x128xf32>
      %cst_42 = arith.constant dense<0.000000e+00> : vector<1xf32>
      %102 = vector.multi_reduction <add>, %101, %cst_42 [1, 2] : vector<1x1x128xf32> to vector<1xf32>
      %103 = vector.shape_cast %102 : vector<1xf32> to vector<1x1x1xf32>
      %104 = vector.extract %103[0, 0, 0] : f32 from vector<1x1x1xf32>
      %c0_43 = arith.constant 0 : index
      %c0_44 = arith.constant 0 : index
      %105 = vector.load %arg7[%c0_43, %c0_44] : memref<1x128xf32, #tpu.memory_space<vmem>>, vector<1x128xf32>
      %106 = vector.shape_cast %105 : vector<1x128xf32> to vector<1x1x128xf32>
      %cst_45 = arith.constant dense<0.000000e+00> : vector<1xf32>
      %107 = vector.multi_reduction <add>, %106, %cst_45 [1, 2] : vector<1x1x128xf32> to vector<1xf32>
      %108 = vector.shape_cast %107 : vector<1xf32> to vector<1x1x1xf32>
      %109 = vector.extract %108[0, 0, 0] : f32 from vector<1x1x1xf32>
      %110 = tpu.iota {dimensions = array<i32: 1>} : vector<1x8x128xi32>
      %c0_i32_46 = arith.constant 0 : i32
      %111 = vector.broadcast %c0_i32_46 : i32 to vector<1x8x128xi32>
      %112 = arith.cmpi eq, %110, %111 : vector<1x8x128xi32>
      %c1_i32_47 = arith.constant 1 : i32
      %113 = vector.broadcast %c1_i32_47 : i32 to vector<1x8x128xi32>
      %114 = arith.cmpi eq, %110, %113 : vector<1x8x128xi32>
      %c2_i32 = arith.constant 2 : i32
      %115 = vector.broadcast %c2_i32 : i32 to vector<1x8x128xi32>
      %116 = arith.cmpi eq, %110, %115 : vector<1x8x128xi32>
      %cst_48 = arith.constant 0.000000e+00 : f32
      %117 = vector.broadcast %109 : f32 to vector<1x8x128xf32>
      %118 = vector.broadcast %cst_48 : f32 to vector<1x8x128xf32>
      %119 = arith.select %116, %117, %118 : vector<1x8x128xi1>, vector<1x8x128xf32>
      %120 = vector.broadcast %104 : f32 to vector<1x8x128xf32>
      %121 = arith.select %114, %120, %119 : vector<1x8x128xi1>, vector<1x8x128xf32>
      %122 = vector.broadcast %99 : f32 to vector<1x8x128xf32>
      %123 = arith.select %112, %122, %121 : vector<1x8x128xi1>, vector<1x8x128xf32>
      %c0_49 = arith.constant 0 : index
      %c0_50 = arith.constant 0 : index
      %c0_51 = arith.constant 0 : index
      %124 = vector.load %arg4[%c0_49, %c0_50, %c0_51] : memref<1x8x128xf32, #tpu.memory_space<vmem>>, vector<1x8x128xf32>
      tpu.vector_store %arg4[%c0_49, %c0_50, %c0_51], %123 {strides = array<i32>} : memref<1x8x128xf32, #tpu.memory_space<vmem>>, vector<1x8x128xf32>,
    } else {
    }
    return
  }
  func.func @transform_0(%arg0: i32, %arg1: i32) -> (i32, i32) {
    %c1_i32 = arith.constant 1 : i32
    %0 = arith.muli %arg0, %c1_i32 : i32
    %1 = arith.addi %0, %arg1 : i32
    %c0_i32 = arith.constant 0 : i32
    %2 = arith.minsi %1, %c0_i32 : i32
    %c0_i32_0 = arith.constant 0 : i32
    %c0_i32_1 = arith.constant 0 : i32
    return %c0_i32_0, %2 : i32, i32
  }
  func.func @transform_1(%arg0: i32, %arg1: i32) -> (i32, i32) {
    %c1_i32 = arith.constant 1 : i32
    %0 = arith.muli %arg0, %c1_i32 : i32
    %1 = arith.addi %0, %arg1 : i32
    %c0_i32 = arith.constant 0 : i32
    %2 = arith.minsi %1, %c0_i32 : i32
    %c0_i32_0 = arith.constant 0 : i32
    %c0_i32_1 = arith.constant 0 : i32
    return %c0_i32_0, %2 : i32, i32
  }
  func.func @transform_2(%arg0: i32, %arg1: i32) -> (i32, i32, i32) {
    %c0_i32 = arith.constant 0 : i32
    %c0_i32_0 = arith.constant 0 : i32
    %c0_i32_1 = arith.constant 0 : i32
    return %arg0, %c0_i32, %c0_i32_0 : i32, i32, i32
  }
}

</mosaic_0001>

<llo_original>
// kernel: tpu_custom_call.1
$region0: #{tpu_custom_call.1}
  #allocation0 [shape = 'u32[]', space=smem, size = 0x4, offset = 0x4, fixed_abs, tag = 'smem constant byte address 0x4 - core index']
  #allocation1 [shape = 'u32[144,128]{1,0:T(1,128)}', space=vmem, size = 0x12000, scoped, tag = 'internal scratch']
  #allocation2 [shape = 'f32[1,128]{1,0:T(1,128)}', space=vmem, size = 0x200, scoped, tag = 'scratch operand']
  #allocation3 [shape = 'f32[1,128]{1,0:T(1,128)}', space=vmem, size = 0x200, scoped, tag = 'scratch operand']
  #allocation4 [shape = 'f32[1,128]{1,0:T(1,128)}', space=vmem, size = 0x200, scoped, tag = 'scratch operand']
  %s0 = inlined_call_operand.hbm [shape: f32[10,16], index: 0, kind: input, shape index: {}]
  %s1 = inlined_call_operand.hbm [shape: f32[10,16], index: 1, kind: input, shape index: {}]
  %s2 = inlined_call_operand.hbm [shape: f32[1,8,128], index: 2, kind: output, shape index: {}]
  %s3 = sld [smem:[#allocation0]]
  $region34: #{tpu_custom_call.1} parent=0
    _
  %s5 = ssub.s32 1, %s3
  %s6 = scalar_select 0, %s5, %s3
  $region1: #{tpu_custom_call.1} parent=0
    #allocation5 [shape = 'u8[8192]{0}', space=vmem, size = 0x2000, scoped, tag = 'input window, operand 0, single buffered']
    #allocation6 [shape = 's32[1]{0}', space=sflag, size = 0x4, scoped, tag = 'scoped memory for tpu_custom_call.1']
    #allocation7 [shape = 's32[1]{0}', space=sflag, size = 0x4, scoped, tag = 'scoped memory for tpu_custom_call.1']
    #allocation8 [shape = 'u8[8192]{0}', space=vmem, size = 0x2000, scoped, tag = 'input window, operand 1, single buffered']
    #allocation9 [shape = 's32[1]{0}', space=sflag, size = 0x4, scoped, tag = 'scoped memory for tpu_custom_call.1']
    #allocation10 [shape = 'u8[4096]{0}', space=vmem, size = 0x1000, scoped, tag = 'output window, operand 0, single buffered']
    %7 = vsyncpa [#allocation6], 0
    %8 = vsyncpa [#allocation9], 0
    %9 = vsyncpa [#allocation7], 0
    // Predicated region
    $region2: #{tpu_custom_call.1} parent=1 // pred_check
      _
    $region3: #{tpu_custom_call.1} parent=1 // pred_check_branch
      %11 = sbr.rel (0) target = $region5
    $region4: #{tpu_custom_call.1} parent=1 // pred_region
      %s12 = sadd.s32 0, 0
      %p13 = scmp.lt.s32.totalorder %s12, 0
      %s14 = scalar_select %p13, %s12, 0
      %s16 = ssub.s32 256, 256
      %17 = vsyncadd [#allocation6], %s16
      %s18 = smul.addr %s14, 128
      %s19 = scalar_lea.hbm %s0, %s18
      %s20 = sshll.u32 [#allocation5], 4
      %s21 = int_to_ptr.vmem [resolvable:$true] %s20
      %26 = dma.hbm_to_vmem [thread:$0]  %s19, 256, %s21, [#allocation6], 128, 128, 8
    $region5: #{tpu_custom_call.1} parent=1 // pred_fallthru
      _
    // Predicated region
    $region6: #{tpu_custom_call.1} parent=1 // pred_check
      _
    $region7: #{tpu_custom_call.1} parent=1 // pred_check_branch
      %28 = sbr.rel (0) target = $region9
    $region8: #{tpu_custom_call.1} parent=1 // pred_region
      %s29 = sadd.s32 0, 0
      %p30 = scmp.lt.s32.totalorder %s29, 0
      %s31 = scalar_select %p30, %s29, 0
      %s33 = ssub.s32 256, 256
      %34 = vsyncadd [#allocation9], %s33
      %s35 = smul.addr %s31, 128
      %s36 = scalar_lea.hbm %s1, %s35
      %s37 = sshll.u32 [#allocation8], 4
      %s38 = int_to_ptr.vmem [resolvable:$true] %s37
      %43 = dma.hbm_to_vmem [thread:$0]  %s36, 256, %s38, [#allocation9], 128, 128, 8
    $region9: #{tpu_custom_call.1} parent=1 // pred_fallthru
      _
    // Predicated region
    $region10: #{tpu_custom_call.1} parent=1 // pred_check
      _
    $region11: #{tpu_custom_call.1} parent=1 // pred_check_branch
      %45 = sbr.rel (0) target = $region13
    $region12: #{tpu_custom_call.1} parent=1 // pred_region
      %46 = dma.done [#allocation6], 256
    $region13: #{tpu_custom_call.1} parent=1 // pred_fallthru
      _
    // Predicated region
    $region14: #{tpu_custom_call.1} parent=1 // pred_check
      _
    $region15: #{tpu_custom_call.1} parent=1 // pred_check_branch
      %48 = sbr.rel (0) target = $region17
    $region16: #{tpu_custom_call.1} parent=1 // pred_region
      %49 = dma.done [#allocation9], 256
    $region17: #{tpu_custom_call.1} parent=1 // pred_fallthru
      _
    %s50 = sadd.s32 0, 0
    %p51 = scmp.lt.s32.totalorder %s50, 0
    %s52 = scalar_select %p51, %s50, 0
    %s53 = sadd.s32 0, 0
    %p54 = scmp.lt.s32.totalorder %s53, 0
    %s55 = scalar_select %p54, %s53, 0
    %p56 = scmp.eq.s32.totalorder 0, 0
    // Predicated region
    $region18: #{tpu_custom_call.1} parent=1 // pred_check
      %p57 = pneg %p56
    $region19: #{tpu_custom_call.1} parent=1 // pred_check_branch
      %59 = sbr.rel (%p57) target = $region21
    $region20: #{tpu_custom_call.1} parent=1 // pred_region
      %60 = vst [vmem:[#allocation2] sm:$0x1] 0.0
      %61 = vst [vmem:[#allocation3] sm:$0x1] 0.0
      %62 = vst [vmem:[#allocation4] sm:$0x1] 0.0
    $region21: #{tpu_custom_call.1} parent=1 // pred_fallthru
      _
    %s63 = sadd.s32 0, 0
    %v64 = vlaneseq
    %v65 = vand.u32 %v64, 127
    %s66 = smul.u32 %s63, 128
    %v67 = vstv %s66
    %v68 = vadd.s32 %v67, %v65
    %vm69 = vcmp.lt.s32.totalorder %v68, 16
    %v70 = vld [vmem:[#allocation5] sm:$0xff]
    %v71 = vld [vmem:[#allocation8] sm:$0xff]
    %v72 = vlaneseq
    %v73 = vshrl.u32 %v72, 7
    %vm74 = vcmp.lt.s32.totalorder %v73, 6
    %v75 = vsel %vm74, 1, 0
    %vm76 = vcmp.eq.s32.totalorder %v75, 1
    %v77 = vsel %vm76, %v71, -inf
    %v78 = vrot.slane %v77, 4
    %v79 = vmax.f32 %v77, %v78
    %v80 = vrot.slane %v79, 2
    %v81 = vmax.f32 %v79, %v80
    %v82 = vrot.slane %v81, 1
    %v83 = vmax.f32 %v81, %v82
    %vm84 = vcmp.eq.f32.partialorder %v77, %v83
    %vm85 = vmand %vm84, %vm76
    %v86 = vsel %vm85, %v73, 6
    %v87 = vrot.slane %v86, 4
    %vm88 = vcmp.lt.s32.totalorder %v86, %v87
    %v89 = vsel %vm88, %v86, %v87
    %v90 = vrot.slane %v89, 2
    %vm91 = vcmp.lt.s32.totalorder %v89, %v90
    %v92 = vsel %vm91, %v89, %v90
    %v93 = vrot.slane %v92, 1
    %vm94 = vcmp.lt.s32.totalorder %v92, %v93
    %v95 = vsel %vm94, %v92, %v93
    %vm96 = vcmp.eq.s32.totalorder %v73, %v95
    %v97 = vsel %vm96, 1, 0
    %v98 = vcvt.s32.f32 %v97
    %v99 = vsel %vm76, %v70, -inf
    %v100 = vrot.slane %v99, 4
    %v101 = vmax.f32 %v99, %v100
    %v102 = vrot.slane %v101, 2
    %v103 = vmax.f32 %v101, %v102
    %v104 = vrot.slane %v103, 1
    %v105 = vmax.f32 %v103, %v104
    %v106 = vsub.f32 %v99, %v105
    %v107 = vmul.f32 %v106, 1.442695
    %v108 = vpow.pop %v107
    %v109 = vrot.slane %v108, 4
    %v110 = vadd.f32 %v108, %v109
    %v111 = vrot.slane %v110, 2
    %v112 = vadd.f32 %v110, %v111
    %v113 = vrot.slane %v112, 1
    %v114 = vadd.f32 %v112, %v113
    %v115 = vlog2.pop %v114
    %v116 = vmul.f32 %v115, 0.6931472
    %v117 = vadd.f32 %v105, %v116
    %v118 = vmul.f32 %v70, %v98
    %v119 = vrot.slane %v118, 4
    %v120 = vadd.f32 %v118, %v119
    %v121 = vrot.slane %v120, 2
    %v122 = vadd.f32 %v120, %v121
    %v123 = vrot.slane %v122, 1
    %v124 = vadd.f32 %v122, %v123
    %v125 = vsub.f32 %v117, %v124
    %v126 = vsel %vm69, %v125, 0.0
    %vm127 = vcmp.ne.s32.totalorder %v95, 0
    %vm128 = vmand %vm127, %vm69
    %v129 = vld [vmem:[#allocation5] sm:$0xff]
    %v130 = vld [vmem:[#allocation5 + $0x8] sm:$0x3]
    %v131 = vld [vmem:[#allocation8] sm:$0xff]
    %v132 = vld [vmem:[#allocation8 + $0x8] sm:$0x3]
    %v133 = vsub.f32 %v129, %v131
    %v134 = vsub.f32 %v130, %v132
    %v135 = vand.u32 2147483647, %v133
    %v136 = vand.u32 2147483647, %v134
    %vm137 = vcmp.lt.f32.partialorder %v135, 1.0
    %vm138 = vcmp.lt.f32.partialorder %v136, 1.0
    %v139 = vmul.f32 %v133, 0.5
    %v140 = vmul.f32 %v134, 0.5
    %v141 = vmul.f32 %v139, %v133
    %v142 = vmul.f32 %v140, %v134
    %v143 = vsub.f32 %v135, 0.5
    %v144 = vsub.f32 %v136, 0.5
    %v145 = vsel %vm137, %v141, %v143
    %v146 = vsel %vm138, %v142, %v144
    %v147 = vadd.s32 %v73, 8
    %vm148 = vcmp.ge.s32.totalorder %v73, 6
    %vm149 = vcmp.ge.s32.totalorder %v147, 6
    %v150 = vsel %vm148, 1, 0
    %v151 = vsel %vm149, 1, 0
    %vm152 = vcmp.eq.s32.totalorder %v150, 1
    %vm153 = vcmp.eq.s32.totalorder %v151, 1
    %v154 = vsel %vm128, 1, 0
    %vm155 = vcmp.eq.s32.totalorder %v154, 1
    %vm156 = vmand %vm152, %vm155
    %vm157 = vmand %vm153, %vm155
    %v158 = vsel %vm156, %v145, 0.0
    %v159 = vsel %vm157, %v146, 0.0
    %vm160 = vcmask 1041408
    %v161 = vsel %vm160, %v159, 0.0
    %v162 = vadd.f32 %v158, %v161
    %v163 = vrot.slane %v162, 4
    %v164 = vadd.f32 %v162, %v163
    %v165 = vrot.slane %v164, 2
    %v166 = vadd.f32 %v164, %v165
    %v167 = vrot.slane %v166, 1
    %v168 = vadd.f32 %v166, %v167
    %v169 = vld [vmem:[#allocation2] sm:$0x1]
    %v170 = vadd.f32 %v169, %v126
    %171 = vst [vmem:[#allocation2] sm:$0x1] %v170
    %v172 = vld [vmem:[#allocation3] sm:$0x1]
    %v173 = vadd.f32 %v172, %v168
    %174 = vst [vmem:[#allocation3] sm:$0x1] %v173
    %v175 = vld [vmem:[#allocation4] sm:$0x1]
    %v176 = vcvt.s32.f32 %v154
    %v177 = vadd.f32 %v175, %v176
    %178 = vst [vmem:[#allocation4] sm:$0x1] %v177
    // Predicated region
    $region22: #{tpu_custom_call.1} parent=1 // pred_check
      %p179 = pneg %p56
    $region23: #{tpu_custom_call.1} parent=1 // pred_check_branch
      %181 = sbr.rel (%p179) target = $region25
    $region24: #{tpu_custom_call.1} parent=1 // pred_region
      %v182 = vld [vmem:[#allocation2] sm:$0x1]
      %vm183 = vcmask 1040384
      %v184 = vsel %vm183, %v182, 0.0
      %185 = vadd.xlane.f32.xlu0 %v184
      %v186 = vpop.xlane.xlu0 %185
      %v187 = vrot.slane %v186, 4
      %v188 = vadd.f32 %v186, %v187
      %v189 = vrot.slane %v188, 2
      %v190 = vadd.f32 %v188, %v189
      %v191 = vrot.slane %v190, 1
      %v192 = vadd.f32 %v190, %v191
      %s193 = vtos %v192
      %v194 = vld [vmem:[#allocation3] sm:$0x1]
      %v195 = vsel %vm183, %v194, 0.0
      %196 = vadd.xlane.f32.xlu0 %v195
      %v197 = vpop.xlane.xlu0 %196
      %v198 = vrot.slane %v197, 4
      %v199 = vadd.f32 %v197, %v198
      %v200 = vrot.slane %v199, 2
      %v201 = vadd.f32 %v199, %v200
      %v202 = vrot.slane %v201, 1
      %v203 = vadd.f32 %v201, %v202
      %s204 = vtos %v203
      %v205 = vld [vmem:[#allocation4] sm:$0x1]
      %v206 = vsel %vm183, %v205, 0.0
      %207 = vadd.xlane.f32.xlu0 %v206
      %v208 = vpop.xlane.xlu0 %207
      %v209 = vrot.slane %v208, 4
      %v210 = vadd.f32 %v208, %v209
      %v211 = vrot.slane %v210, 2
      %v212 = vadd.f32 %v210, %v211
      %v213 = vrot.slane %v212, 1
      %v214 = vadd.f32 %v212, %v213
      %s215 = vtos %v214
      %vm216 = vcmp.eq.s32.totalorder %v73, 0
      %vm217 = vcmp.eq.s32.totalorder %v73, 1
      %vm218 = vcmp.eq.s32.totalorder %v73, 2
      %v219 = vstv %s215
      %v220 = vsel %vm218, %v219, 0.0
      %v221 = vstv %s204
      %v222 = vsel %vm217, %v221, %v220
      %v223 = vstv %s193
      %v224 = vsel %vm216, %v223, %v222
      %225 = vst [vmem:[#allocation10] sm:$0xff] %v224
    $region25: #{tpu_custom_call.1} parent=1 // pred_fallthru
      _
    // Predicated region
    $region26: #{tpu_custom_call.1} parent=1 // pred_check
      _
    $region27: #{tpu_custom_call.1} parent=1 // pred_check_branch
      %227 = sbr.rel (0) target = $region29
    $region28: #{tpu_custom_call.1} parent=1 // pred_region
      %s229 = ssub.s32 128, 128
      %230 = vsyncadd [#allocation7], %s229
      %s232 = sshll.u32 [#allocation10], 4
      %s233 = int_to_ptr.vmem [resolvable:$true] %s232
      %235 = dma.vmem_to_hbm [thread:$0]  %s233, 128, %s2, [#allocation7]
    $region29: #{tpu_custom_call.1} parent=1 // pred_fallthru
      _
    // Predicated region
    $region30: #{tpu_custom_call.1} parent=1 // pred_check
      _
    $region31: #{tpu_custom_call.1} parent=1 // pred_check_branch
      %237 = sbr.rel (0) target = $region33
    $region32: #{tpu_custom_call.1} parent=1 // pred_region
      %238 = dma.done [#allocation7], 128
    $region33: #{tpu_custom_call.1} parent=1 // pred_fallthru
      _
    %239 = vsyncpa [#allocation6], 1
    %240 = vsyncpa [#allocation9], 1
    %241 = vsyncpa [#allocation7], 1

</llo_original>
